<compile_context>
chip_gen: v7x
topology: tpu7x:2x2x1
jax: 0.10.0
libtpu: 0.0.40
codegen_flags: <defaults>
</compile_context>

<pallas_src>
import functools

import jax
import jax.numpy as jnp
from jax import lax
from jax.experimental import pallas as pl
from jax.experimental.pallas import tpu as pltpu


# ----------------------------------------------------------------------------
# Fused kernel: conv1 + conv2 + concat/flatten + MLP(+transform) + concat + cnn
# ----------------------------------------------------------------------------
def _styletransfer_kernel(p_ref, in1a_ref,
                          w1c_ref, b1c_ref, w2c_ref, b2c_ref,
                          wm1_ref, bm1_ref, wm2_ref, bm2_ref,
                          wc1_ref, bc1_ref, wc2_ref, bc2_ref,
                          out_ref, a_sc, *,
                          n_batch, c_out, hw, d_mlp, d_cnn, d_1a):
    f32 = jnp.float32

    # --- encoders: conv-as-matmul, one lane-dense MXU pass each.
    #     p_ref[e] : (Cin*KH*KW=18, N*HW=128), column index = n*HW + hw
    c1 = jnp.dot(w1c_ref[...], p_ref[0], preferred_element_type=f32) + b1c_ref[...]
    c1 = jnp.maximum(c1, 0.0)                               # (Cout, N*HW)
    c2 = jnp.dot(w2c_ref[...], p_ref[1], preferred_element_type=f32) + b2c_ref[...]
    c2 = jnp.maximum(c2, 0.0)                               # (Cout, N*HW)

    # --- torch.cat((e1,e2),dim=1).view(N,-1): scatter into a (N, 2*Cout*HW) slab.
    #     feature index f = e*Cout*HW + co*HW + hw  (matches mlp_w1 row order).
    for e, c in enumerate((c1, c2)):
        for co in range(c_out):
            f0 = (e * c_out + co) * hw
            for n in range(n_batch):
                a_sc[n:n + 1, f0:f0 + hw] = c[co:co + 1, n * hw:(n + 1) * hw]

    # --- mlp: Linear(512->64) + ReLU + Linear(64->16), custom_transform fused.
    h = jnp.dot(a_sc[...], wm1_ref[...], preferred_element_type=f32) + bm1_ref[...]
    h = jnp.maximum(h, 0.0)                                 # (N, 64)
    y = jnp.dot(h, wm2_ref[...], preferred_element_type=f32) + bm2_ref[...]
    y = -20.0 + jax.nn.sigmoid(y * 1e-5) * 40.0             # custom_transform (N, 16)

    # --- cnn: torch.cat((input1a, y), dim=1) folded into a split first-layer dot.
    h2 = (jnp.dot(in1a_ref[...], wc1_ref[0:d_1a, :], preferred_element_type=f32)
          + jnp.dot(y, wc1_ref[d_1a:d_1a + d_mlp, :], preferred_element_type=f32)
          + bc1_ref[...])
    h2 = jnp.maximum(h2, 0.0)                               # (N, 32)
    z = jnp.dot(h2, wc2_ref[...], preferred_element_type=f32) + bc2_ref[...]   # (N, 8)

    # --- single lane-dense output slab: [:, :16] = mlp_output, [:, 16:24] = cnn_output.
    out_ref[...] = jnp.zeros_like(out_ref)
    out_ref[:, 0:d_mlp] = y.astype(out_ref.dtype)
    out_ref[:, d_mlp:d_mlp + d_cnn] = z.astype(out_ref.dtype)


# ----------------------------------------------------------------------------
# Wrapper glue
# ----------------------------------------------------------------------------
def _im2col_pair(x1, x2):
    """Stacks the two NCHW encoder inputs and builds 3x3/stride-1/pad-1 im2col
    patches: returns (2, Cin*9, N*H*W) with row = ci*9 + kh*3 + kw (matching
    w.reshape(Cout, Cin*9)) and column = n*H*W + i*W + j."""
    N, Cin, H, W = x1.shape
    xs = jnp.stack([x1, x2], axis=0)                              # (2, N, Cin, H, W)
    xp = jnp.pad(xs, ((0, 0), (0, 0), (0, 0), (1, 1), (1, 1)))
    cols = [xp[..., kh:kh + H, kw:kw + W] for kh in range(3) for kw in range(3)]
    p = jnp.stack(cols, axis=3)                                   # (2, N, Cin, 9, H, W)
    p = p.transpose(0, 2, 3, 1, 4, 5)                             # (2, Cin, 9, N, H, W)
    return p.reshape(2, Cin * 9, N * H * W)


@jax.jit
def styletransfer_forward(params, input1a_stft, input2b_stft, input1a):
    N, Cin, H, W = input1a_stft.shape
    Cout = params["enc1_w"].shape[0]
    HW = H * W
    D_mlp = params["mlp_w2"].shape[1]
    D_cnn = params["cnn_w2"].shape[1]
    D_1a = input1a.shape[1]
    D_slab = 128                                   # lane-dense output slab width

    patches = _im2col_pair(input1a_stft, input2b_stft)            # (2, 18, N*HW)

    w1c = params["enc1_w"].reshape(Cout, Cin * 9)
    b1c = params["enc1_b"].reshape(Cout, 1)
    w2c = params["enc2_w"].reshape(Cout, Cin * 9)
    b2c = params["enc2_b"].reshape(Cout, 1)

    kernel = functools.partial(
        _styletransfer_kernel,
        n_batch=N, c_out=Cout, hw=HW, d_mlp=D_mlp, d_cnn=D_cnn, d_1a=D_1a)

    vmem_specs = [pl.BlockSpec(memory_space=pltpu.MemorySpace.VMEM)
                  for _ in range(14)]

    slab = pl.pallas_call(
        kernel,
        out_shape=jax.ShapeDtypeStruct((N, D_slab), jnp.float32),
        in_specs=vmem_specs,
        out_specs=pl.BlockSpec(memory_space=pltpu.MemorySpace.VMEM),
        scratch_shapes=[pltpu.VMEM((N, 2 * Cout * HW), jnp.float32)],
    )(patches, input1a,
      w1c, b1c, w2c, b2c,
      params["mlp_w1"], params["mlp_b1"].reshape(1, -1),
      params["mlp_w2"], params["mlp_b2"].reshape(1, -1),
      params["cnn_w1"], params["cnn_b1"].reshape(1, -1),
      params["cnn_w2"], params["cnn_b2"].reshape(1, -1))

    mlp_output = slab[:, :D_mlp]
    cnn_output = slab[:, D_mlp:D_mlp + D_cnn]
    return cnn_output, mlp_output


# ----------------------------------------------------------------------------
# Pure-JAX reference (for correctness check)
# ----------------------------------------------------------------------------
def reference_forward(params, input1a_stft, input2b_stft, input1a):
    def conv(x, w, b):
        y = lax.conv_general_dilated(
            x, w, window_strides=(1, 1), padding=((1, 1), (1, 1)),
            dimension_numbers=("NCHW", "OIHW", "NCHW"))
        return jnp.maximum(y + b[None, :, None, None], 0.0)

    def mlp(x, w1, b1, w2, b2):
        h = jnp.maximum(x @ w1 + b1, 0.0)
        return h @ w2 + b2

    e1 = conv(input1a_stft, params["enc1_w"], params["enc1_b"])
    e2 = conv(input2b_stft, params["enc2_w"], params["enc2_b"])
    N = e1.shape[0]
    cat = jnp.concatenate([e1, e2], axis=1).reshape(N, -1)
    m = mlp(cat, params["mlp_w1"], params["mlp_b1"], params["mlp_w2"], params["mlp_b2"])
    m = -20.0 + jax.nn.sigmoid(m / 100000.0) * 40.0
    cat2 = jnp.concatenate([input1a, m], axis=1)
    c = mlp(cat2, params["cnn_w1"], params["cnn_b1"], params["cnn_w2"], params["cnn_b2"])
    return c, m


# ----------------------------------------------------------------------------
if __name__ == "__main__":
    # shapes
    N, Cin, H, W = 2, 2, 8, 8
    Cout = 4
    D_flat = 2 * Cout * H * W          # 512
    D_h1, D_mlp = 64, 16
    D_1a = 32
    D_cnn_in, D_cnn_h, D_cnn_out = D_1a + D_mlp, 32, 8

    key = jax.random.PRNGKey(0)
    ks = jax.random.split(key, 16)
    f32 = jnp.float32

    params = {
        "enc1_w": 0.1 * jax.random.normal(ks[0], (Cout, Cin, 3, 3), f32),
        "enc1_b": 0.1 * jax.random.normal(ks[1], (Cout,), f32),
        "enc2_w": 0.1 * jax.random.normal(ks[2], (Cout, Cin, 3, 3), f32),
        "enc2_b": 0.1 * jax.random.normal(ks[3], (Cout,), f32),
        "mlp_w1": 0.05 * jax.random.normal(ks[4], (D_flat, D_h1), f32),
        "mlp_b1": 0.05 * jax.random.normal(ks[5], (D_h1,), f32),
        "mlp_w2": 0.05 * jax.random.normal(ks[6], (D_h1, D_mlp), f32),
        "mlp_b2": 0.05 * jax.random.normal(ks[7], (D_mlp,), f32),
        "cnn_w1": 0.05 * jax.random.normal(ks[8], (D_cnn_in, D_cnn_h), f32),
        "cnn_b1": 0.05 * jax.random.normal(ks[9], (D_cnn_h,), f32),
        "cnn_w2": 0.05 * jax.random.normal(ks[10], (D_cnn_h, D_cnn_out), f32),
        "cnn_b2": 0.05 * jax.random.normal(ks[11], (D_cnn_out,), f32),
    }

    input1a_stft = jax.random.normal(ks[12], (N, Cin, H, W), f32)
    input2b_stft = jax.random.normal(ks[13], (N, Cin, H, W), f32)
    input1a = jax.random.normal(ks[14], (N, D_1a), f32)

    cnn_out, mlp_out = styletransfer_forward(params, input1a_stft, input2b_stft, input1a)
    jax.block_until_ready((cnn_out, mlp_out))

    ref_cnn, ref_mlp = reference_forward(params, input1a_stft, input2b_stft, input1a)
    assert cnn_out.shape == (N, D_cnn_out) and mlp_out.shape == (N, D_mlp)
    assert jnp.allclose(cnn_out, ref_cnn, atol=1e-4, rtol=1e-4)
    assert jnp.allclose(mlp_out, ref_mlp, atol=1e-4, rtol=1e-4)

    print("KERNEL_OK")
</pallas_src>

<mosaic_0001>
module attributes {stable_mosaic.version = 11 : i64} {
  func.func @_styletransfer_kernel(%arg0: memref<2x18x128xf32, #tpu.memory_space<vmem>>, %arg1: memref<2x32xf32, #tpu.memory_space<vmem>>, %arg2: memref<4x18xf32, #tpu.memory_space<vmem>>, %arg3: memref<4x1xf32, #tpu.memory_space<vmem>>, %arg4: memref<4x18xf32, #tpu.memory_space<vmem>>, %arg5: memref<4x1xf32, #tpu.memory_space<vmem>>, %arg6: memref<512x64xf32, #tpu.memory_space<vmem>>, %arg7: memref<1x64xf32, #tpu.memory_space<vmem>>, %arg8: memref<64x16xf32, #tpu.memory_space<vmem>>, %arg9: memref<1x16xf32, #tpu.memory_space<vmem>>, %arg10: memref<48x32xf32, #tpu.memory_space<vmem>>, %arg11: memref<1x32xf32, #tpu.memory_space<vmem>>, %arg12: memref<32x8xf32, #tpu.memory_space<vmem>>, %arg13: memref<1x8xf32, #tpu.memory_space<vmem>>, %arg14: memref<2x128xf32, #tpu.memory_space<vmem>>, %arg15: memref<2x512xf32, #tpu.memory_space<vmem>>) attributes {dimension_semantics = [], scalar_prefetch = 0 : i64, scratch_operands = 1 : i64, tpu.core_type = #tpu.core_type<tc>} {
    %c0 = arith.constant 0 : index
    %c0_0 = arith.constant 0 : index
    %0 = vector.load %arg2[%c0, %c0_0] : memref<4x18xf32, #tpu.memory_space<vmem>>, vector<4x18xf32>
    %c0_1 = arith.constant 0 : index
    %c0_2 = arith.constant 0 : index
    %c0_3 = arith.constant 0 : index
    %1 = vector.load %arg0[%c0_1, %c0_2, %c0_3] : memref<2x18x128xf32, #tpu.memory_space<vmem>>, vector<1x18x128xf32>
    %2 = vector.shape_cast %1 : vector<1x18x128xf32> to vector<18x128xf32>
    %cst = arith.constant dense<0.000000e+00> : vector<4x128xf32>
    %3 = tpu.matmul %0, %2, %cst {dimension_numbers = #tpu.dot_dimension_numbers<[1], [0], [0], [1], [0, 0, 1, 1], [], []>} : vector<4x18xf32>, vector<18x128xf32>, vector<4x128xf32> -> vector<4x128xf32>
    %c0_4 = arith.constant 0 : index
    %c0_5 = arith.constant 0 : index
    %4 = vector.load %arg3[%c0_4, %c0_5] : memref<4x1xf32, #tpu.memory_space<vmem>>, vector<4x1xf32>
    %5 = vector.broadcast %4 : vector<4x1xf32> to vector<4x128xf32>
    %6 = arith.addf %3, %5 : vector<4x128xf32>
    %cst_6 = arith.constant 0.000000e+00 : f32
    %7 = vector.broadcast %cst_6 : f32 to vector<4x128xf32>
    %8 = arith.maximumf %6, %7 : vector<4x128xf32>
    %c0_7 = arith.constant 0 : index
    %c0_8 = arith.constant 0 : index
    %9 = vector.load %arg4[%c0_7, %c0_8] : memref<4x18xf32, #tpu.memory_space<vmem>>, vector<4x18xf32>
    %c1 = arith.constant 1 : index
    %c0_9 = arith.constant 0 : index
    %c0_10 = arith.constant 0 : index
    %10 = vector.load %arg0[%c1, %c0_9, %c0_10] : memref<2x18x128xf32, #tpu.memory_space<vmem>>, vector<1x18x128xf32>
    %11 = vector.shape_cast %10 : vector<1x18x128xf32> to vector<18x128xf32>
    %cst_11 = arith.constant dense<0.000000e+00> : vector<4x128xf32>
    %12 = tpu.matmul %9, %11, %cst_11 {dimension_numbers = #tpu.dot_dimension_numbers<[1], [0], [0], [1], [0, 0, 1, 1], [], []>} : vector<4x18xf32>, vector<18x128xf32>, vector<4x128xf32> -> vector<4x128xf32>
    %c0_12 = arith.constant 0 : index
    %c0_13 = arith.constant 0 : index
    %13 = vector.load %arg5[%c0_12, %c0_13] : memref<4x1xf32, #tpu.memory_space<vmem>>, vector<4x1xf32>
    %14 = vector.broadcast %13 : vector<4x1xf32> to vector<4x128xf32>
    %15 = arith.addf %12, %14 : vector<4x128xf32>
    %cst_14 = arith.constant 0.000000e+00 : f32
    %16 = vector.broadcast %cst_14 : f32 to vector<4x128xf32>
    %17 = arith.maximumf %15, %16 : vector<4x128xf32>
    %18 = vector.extract_strided_slice %8 {offsets = [0, 0], sizes = [1, 64], strides = [1, 1]} : vector<4x128xf32> to vector<1x64xf32>
    %c0_15 = arith.constant 0 : index
    %c0_16 = arith.constant 0 : index
    %19 = vector.load %arg15[%c0_15, %c0_16] : memref<2x512xf32, #tpu.memory_space<vmem>>, vector<1x64xf32>
    tpu.vector_store %arg15[%c0_15, %c0_16], %18 {strides = array<i32>} : memref<2x512xf32, #tpu.memory_space<vmem>>, vector<1x64xf32>,
    %20 = vector.extract_strided_slice %8 {offsets = [0, 64], sizes = [1, 64], strides = [1, 1]} : vector<4x128xf32> to vector<1x64xf32>
    %c1_17 = arith.constant 1 : index
    %c0_18 = arith.constant 0 : index
    %21 = vector.load %arg15[%c1_17, %c0_18] : memref<2x512xf32, #tpu.memory_space<vmem>>, vector<1x64xf32>
    tpu.vector_store %arg15[%c1_17, %c0_18], %20 {strides = array<i32>} : memref<2x512xf32, #tpu.memory_space<vmem>>, vector<1x64xf32>,
    %22 = vector.extract_strided_slice %8 {offsets = [1, 0], sizes = [1, 64], strides = [1, 1]} : vector<4x128xf32> to vector<1x64xf32>
    %c0_19 = arith.constant 0 : index
    %c64 = arith.constant 64 : index
    %23 = vector.load %arg15[%c0_19, %c64] : memref<2x512xf32, #tpu.memory_space<vmem>>, vector<1x64xf32>
    tpu.vector_store %arg15[%c0_19, %c64], %22 {strides = array<i32>} : memref<2x512xf32, #tpu.memory_space<vmem>>, vector<1x64xf32>,
    %24 = vector.extract_strided_slice %8 {offsets = [1, 64], sizes = [1, 64], strides = [1, 1]} : vector<4x128xf32> to vector<1x64xf32>
    %c1_20 = arith.constant 1 : index
    %c64_21 = arith.constant 64 : index
    %25 = vector.load %arg15[%c1_20, %c64_21] : memref<2x512xf32, #tpu.memory_space<vmem>>, vector<1x64xf32>
    tpu.vector_store %arg15[%c1_20, %c64_21], %24 {strides = array<i32>} : memref<2x512xf32, #tpu.memory_space<vmem>>, vector<1x64xf32>,
    %26 = vector.extract_strided_slice %8 {offsets = [2, 0], sizes = [1, 64], strides = [1, 1]} : vector<4x128xf32> to vector<1x64xf32>
    %c0_22 = arith.constant 0 : index
    %c128 = arith.constant 128 : index
    %27 = vector.load %arg15[%c0_22, %c128] : memref<2x512xf32, #tpu.memory_space<vmem>>, vector<1x64xf32>
    tpu.vector_store %arg15[%c0_22, %c128], %26 {strides = array<i32>} : memref<2x512xf32, #tpu.memory_space<vmem>>, vector<1x64xf32>,
    %28 = vector.extract_strided_slice %8 {offsets = [2, 64], sizes = [1, 64], strides = [1, 1]} : vector<4x128xf32> to vector<1x64xf32>
    %c1_23 = arith.constant 1 : index
    %c128_24 = arith.constant 128 : index
    %29 = vector.load %arg15[%c1_23, %c128_24] : memref<2x512xf32, #tpu.memory_space<vmem>>, vector<1x64xf32>
    tpu.vector_store %arg15[%c1_23, %c128_24], %28 {strides = array<i32>} : memref<2x512xf32, #tpu.memory_space<vmem>>, vector<1x64xf32>,
    %30 = vector.extract_strided_slice %8 {offsets = [3, 0], sizes = [1, 64], strides = [1, 1]} : vector<4x128xf32> to vector<1x64xf32>
    %c0_25 = arith.constant 0 : index
    %c192 = arith.constant 192 : index
    %31 = vector.load %arg15[%c0_25, %c192] : memref<2x512xf32, #tpu.memory_space<vmem>>, vector<1x64xf32>
    tpu.vector_store %arg15[%c0_25, %c192], %30 {strides = array<i32>} : memref<2x512xf32, #tpu.memory_space<vmem>>, vector<1x64xf32>,
    %32 = vector.extract_strided_slice %8 {offsets = [3, 64], sizes = [1, 64], strides = [1, 1]} : vector<4x128xf32> to vector<1x64xf32>
    %c1_26 = arith.constant 1 : index
    %c192_27 = arith.constant 192 : index
    %33 = vector.load %arg15[%c1_26, %c192_27] : memref<2x512xf32, #tpu.memory_space<vmem>>, vector<1x64xf32>
    tpu.vector_store %arg15[%c1_26, %c192_27], %32 {strides = array<i32>} : memref<2x512xf32, #tpu.memory_space<vmem>>, vector<1x64xf32>,
    %34 = vector.extract_strided_slice %17 {offsets = [0, 0], sizes = [1, 64], strides = [1, 1]} : vector<4x128xf32> to vector<1x64xf32>
    %c0_28 = arith.constant 0 : index
    %c256 = arith.constant 256 : index
    %35 = vector.load %arg15[%c0_28, %c256] : memref<2x512xf32, #tpu.memory_space<vmem>>, vector<1x64xf32>
    tpu.vector_store %arg15[%c0_28, %c256], %34 {strides = array<i32>} : memref<2x512xf32, #tpu.memory_space<vmem>>, vector<1x64xf32>,
    %36 = vector.extract_strided_slice %17 {offsets = [0, 64], sizes = [1, 64], strides = [1, 1]} : vector<4x128xf32> to vector<1x64xf32>
    %c1_29 = arith.constant 1 : index
    %c256_30 = arith.constant 256 : index
    %37 = vector.load %arg15[%c1_29, %c256_30] : memref<2x512xf32, #tpu.memory_space<vmem>>, vector<1x64xf32>
    tpu.vector_store %arg15[%c1_29, %c256_30], %36 {strides = array<i32>} : memref<2x512xf32, #tpu.memory_space<vmem>>, vector<1x64xf32>,
    %38 = vector.extract_strided_slice %17 {offsets = [1, 0], sizes = [1, 64], strides = [1, 1]} : vector<4x128xf32> to vector<1x64xf32>
    %c0_31 = arith.constant 0 : index
    %c320 = arith.constant 320 : index
    %39 = vector.load %arg15[%c0_31, %c320] : memref<2x512xf32, #tpu.memory_space<vmem>>, vector<1x64xf32>
    tpu.vector_store %arg15[%c0_31, %c320], %38 {strides = array<i32>} : memref<2x512xf32, #tpu.memory_space<vmem>>, vector<1x64xf32>,
    %40 = vector.extract_strided_slice %17 {offsets = [1, 64], sizes = [1, 64], strides = [1, 1]} : vector<4x128xf32> to vector<1x64xf32>
    %c1_32 = arith.constant 1 : index
    %c320_33 = arith.constant 320 : index
    %41 = vector.load %arg15[%c1_32, %c320_33] : memref<2x512xf32, #tpu.memory_space<vmem>>, vector<1x64xf32>
    tpu.vector_store %arg15[%c1_32, %c320_33], %40 {strides = array<i32>} : memref<2x512xf32, #tpu.memory_space<vmem>>, vector<1x64xf32>,
    %42 = vector.extract_strided_slice %17 {offsets = [2, 0], sizes = [1, 64], strides = [1, 1]} : vector<4x128xf32> to vector<1x64xf32>
    %c0_34 = arith.constant 0 : index
    %c384 = arith.constant 384 : index
    %43 = vector.load %arg15[%c0_34, %c384] : memref<2x512xf32, #tpu.memory_space<vmem>>, vector<1x64xf32>
    tpu.vector_store %arg15[%c0_34, %c384], %42 {strides = array<i32>} : memref<2x512xf32, #tpu.memory_space<vmem>>, vector<1x64xf32>,
    %44 = vector.extract_strided_slice %17 {offsets = [2, 64], sizes = [1, 64], strides = [1, 1]} : vector<4x128xf32> to vector<1x64xf32>
    %c1_35 = arith.constant 1 : index
    %c384_36 = arith.constant 384 : index
    %45 = vector.load %arg15[%c1_35, %c384_36] : memref<2x512xf32, #tpu.memory_space<vmem>>, vector<1x64xf32>
    tpu.vector_store %arg15[%c1_35, %c384_36], %44 {strides = array<i32>} : memref<2x512xf32, #tpu.memory_space<vmem>>, vector<1x64xf32>,
    %46 = vector.extract_strided_slice %17 {offsets = [3, 0], sizes = [1, 64], strides = [1, 1]} : vector<4x128xf32> to vector<1x64xf32>
    %c0_37 = arith.constant 0 : index
    %c448 = arith.constant 448 : index
    %47 = vector.load %arg15[%c0_37, %c448] : memref<2x512xf32, #tpu.memory_space<vmem>>, vector<1x64xf32>
    tpu.vector_store %arg15[%c0_37, %c448], %46 {strides = array<i32>} : memref<2x512xf32, #tpu.memory_space<vmem>>, vector<1x64xf32>,
    %48 = vector.extract_strided_slice %17 {offsets = [3, 64], sizes = [1, 64], strides = [1, 1]} : vector<4x128xf32> to vector<1x64xf32>
    %c1_38 = arith.constant 1 : index
    %c448_39 = arith.constant 448 : index
    %49 = vector.load %arg15[%c1_38, %c448_39] : memref<2x512xf32, #tpu.memory_space<vmem>>, vector<1x64xf32>
    tpu.vector_store %arg15[%c1_38, %c448_39], %48 {strides = array<i32>} : memref<2x512xf32, #tpu.memory_space<vmem>>, vector<1x64xf32>,
    %c0_40 = arith.constant 0 : index
    %c0_41 = arith.constant 0 : index
    %50 = vector.load %arg15[%c0_40, %c0_41] : memref<2x512xf32, #tpu.memory_space<vmem>>, vector<2x512xf32>
    %c0_42 = arith.constant 0 : index
    %c0_43 = arith.constant 0 : index
    %51 = vector.load %arg6[%c0_42, %c0_43] : memref<512x64xf32, #tpu.memory_space<vmem>>, vector<512x64xf32>
    %cst_44 = arith.constant dense<0.000000e+00> : vector<2x64xf32>
    %52 = tpu.matmul %50, %51, %cst_44 {dimension_numbers = #tpu.dot_dimension_numbers<[1], [0], [0], [1], [0, 0, 1, 1], [], []>} : vector<2x512xf32>, vector<512x64xf32>, vector<2x64xf32> -> vector<2x64xf32>
    %c0_45 = arith.constant 0 : index
    %c0_46 = arith.constant 0 : index
    %53 = vector.load %arg7[%c0_45, %c0_46] : memref<1x64xf32, #tpu.memory_space<vmem>>, vector<1x64xf32>
    %54 = vector.broadcast %53 : vector<1x64xf32> to vector<2x64xf32>
    %55 = arith.addf %52, %54 : vector<2x64xf32>
    %cst_47 = arith.constant 0.000000e+00 : f32
    %56 = vector.broadcast %cst_47 : f32 to vector<2x64xf32>
    %57 = arith.maximumf %55, %56 : vector<2x64xf32>
    %c0_48 = arith.constant 0 : index
    %c0_49 = arith.constant 0 : index
    %58 = vector.load %arg8[%c0_48, %c0_49] : memref<64x16xf32, #tpu.memory_space<vmem>>, vector<64x16xf32>
    %cst_50 = arith.constant dense<0.000000e+00> : vector<2x16xf32>
    %59 = tpu.matmul %57, %58, %cst_50 {dimension_numbers = #tpu.dot_dimension_numbers<[1], [0], [0], [1], [0, 0, 1, 1], [], []>} : vector<2x64xf32>, vector<64x16xf32>, vector<2x16xf32> -> vector<2x16xf32>
    %c0_51 = arith.constant 0 : index
    %c0_52 = arith.constant 0 : index
    %60 = vector.load %arg9[%c0_51, %c0_52] : memref<1x16xf32, #tpu.memory_space<vmem>>, vector<1x16xf32>
    %61 = vector.broadcast %60 : vector<1x16xf32> to vector<2x16xf32>
    %62 = arith.addf %59, %61 : vector<2x16xf32>
    %cst_53 = arith.constant 9.99999974E-6 : f32
    %63 = vector.broadcast %cst_53 : f32 to vector<2x16xf32>
    %64 = arith.mulf %62, %63 : vector<2x16xf32>
    %65 = arith.negf %64 : vector<2x16xf32>
    %66 = math.exp %65 : vector<2x16xf32>
    %cst_54 = arith.constant 1.000000e+00 : f32
    %67 = vector.broadcast %cst_54 : f32 to vector<2x16xf32>
    %68 = arith.addf %67, %66 : vector<2x16xf32>
    %69 = arith.divf %67, %68 : vector<2x16xf32>
    %cst_55 = arith.constant 4.000000e+01 : f32
    %70 = vector.broadcast %cst_55 : f32 to vector<2x16xf32>
    %71 = arith.mulf %69, %70 : vector<2x16xf32>
    %cst_56 = arith.constant -2.000000e+01 : f32
    %72 = vector.broadcast %cst_56 : f32 to vector<2x16xf32>
    %73 = arith.addf %72, %71 : vector<2x16xf32>
    %c0_57 = arith.constant 0 : index
    %c0_58 = arith.constant 0 : index
    %74 = vector.load %arg1[%c0_57, %c0_58] : memref<2x32xf32, #tpu.memory_space<vmem>>, vector<2x32xf32>
    %c0_59 = arith.constant 0 : index
    %c0_60 = arith.constant 0 : index
    %75 = vector.load %arg10[%c0_59, %c0_60] : memref<48x32xf32, #tpu.memory_space<vmem>>, vector<32x32xf32>
    %cst_61 = arith.constant dense<0.000000e+00> : vector<2x32xf32>
    %76 = tpu.matmul %74, %75, %cst_61 {dimension_numbers = #tpu.dot_dimension_numbers<[1], [0], [0], [1], [0, 0, 1, 1], [], []>} : vector<2x32xf32>, vector<32x32xf32>, vector<2x32xf32> -> vector<2x32xf32>
    %c32 = arith.constant 32 : index
    %c0_62 = arith.constant 0 : index
    %77 = vector.load %arg10[%c32, %c0_62] : memref<48x32xf32, #tpu.memory_space<vmem>>, vector<16x32xf32>
    %cst_63 = arith.constant dense<0.000000e+00> : vector<2x32xf32>
    %78 = tpu.matmul %73, %77, %cst_63 {dimension_numbers = #tpu.dot_dimension_numbers<[1], [0], [0], [1], [0, 0, 1, 1], [], []>} : vector<2x16xf32>, vector<16x32xf32>, vector<2x32xf32> -> vector<2x32xf32>
    %79 = arith.addf %76, %78 : vector<2x32xf32>
    %c0_64 = arith.constant 0 : index
    %c0_65 = arith.constant 0 : index
    %80 = vector.load %arg11[%c0_64, %c0_65] : memref<1x32xf32, #tpu.memory_space<vmem>>, vector<1x32xf32>
    %81 = vector.broadcast %80 : vector<1x32xf32> to vector<2x32xf32>
    %82 = arith.addf %79, %81 : vector<2x32xf32>
    %cst_66 = arith.constant 0.000000e+00 : f32
    %83 = vector.broadcast %cst_66 : f32 to vector<2x32xf32>
    %84 = arith.maximumf %82, %83 : vector<2x32xf32>
    %c0_67 = arith.constant 0 : index
    %c0_68 = arith.constant 0 : index
    %85 = vector.load %arg12[%c0_67, %c0_68] : memref<32x8xf32, #tpu.memory_space<vmem>>, vector<32x8xf32>
    %cst_69 = arith.constant dense<0.000000e+00> : vector<2x8xf32>
    %86 = tpu.matmul %84, %85, %cst_69 {dimension_numbers = #tpu.dot_dimension_numbers<[1], [0], [0], [1], [0, 0, 1, 1], [], []>} : vector<2x32xf32>, vector<32x8xf32>, vector<2x8xf32> -> vector<2x8xf32>
    %c0_70 = arith.constant 0 : index
    %c0_71 = arith.constant 0 : index
    %87 = vector.load %arg13[%c0_70, %c0_71] : memref<1x8xf32, #tpu.memory_space<vmem>>, vector<1x8xf32>
    %88 = vector.broadcast %87 : vector<1x8xf32> to vector<2x8xf32>
    %89 = arith.addf %86, %88 : vector<2x8xf32>
    %cst_72 = arith.constant 0.000000e+00 : f32
    %90 = vector.broadcast %cst_72 : f32 to vector<2x128xf32>
    %c0_73 = arith.constant 0 : index
    %c0_74 = arith.constant 0 : index
    %91 = vector.load %arg14[%c0_73, %c0_74] : memref<2x128xf32, #tpu.memory_space<vmem>>, vector<2x128xf32>
    tpu.vector_store %arg14[%c0_73, %c0_74], %90 {strides = array<i32>} : memref<2x128xf32, #tpu.memory_space<vmem>>, vector<2x128xf32>,
    %c0_75 = arith.constant 0 : index
    %c0_76 = arith.constant 0 : index
    %92 = vector.load %arg14[%c0_75, %c0_76] : memref<2x128xf32, #tpu.memory_space<vmem>>, vector<2x16xf32>
    tpu.vector_store %arg14[%c0_75, %c0_76], %73 {strides = array<i32>} : memref<2x128xf32, #tpu.memory_space<vmem>>, vector<2x16xf32>,
    %c0_77 = arith.constant 0 : index
    %c16 = arith.constant 16 : index
    %93 = vector.load %arg14[%c0_77, %c16] : memref<2x128xf32, #tpu.memory_space<vmem>>, vector<2x8xf32>
    tpu.vector_store %arg14[%c0_77, %c16], %89 {strides = array<i32>} : memref<2x128xf32, #tpu.memory_space<vmem>>, vector<2x8xf32>,
    return
  }
}

</mosaic_0001>

<llo_original>
// kernel: styletransfer_forward.1
$region0: #{styletransfer_forward.1}
  #allocation0 [shape = 'u32[]', space=smem, size = 0x4, offset = 0x4, fixed_abs, tag = 'smem constant byte address 0x4 - core index']
  #allocation1 [shape = 'u32[144,128]{1,0:T(1,128)}', space=vmem, size = 0x12000, scoped, tag = 'internal scratch']
  #allocation2 [shape = 'f32[2,512]{1,0:T(2,128)}', space=vmem, size = 0x1000, scoped, tag = 'scratch operand']
  %s0 = inlined_call_operand.vmem [shape: f32[2,18,128], index: 0, kind: input, shape index: {}]
  %s1 = inlined_call_operand.vmem [shape: f32[2,32], index: 1, kind: input, shape index: {}]
  %s2 = inlined_call_operand.vmem [shape: f32[4,18], index: 2, kind: input, shape index: {}]
  %s3 = inlined_call_operand.vmem [shape: f32[4,1], index: 3, kind: input, shape index: {}]
  %s4 = inlined_call_operand.vmem [shape: f32[4,18], index: 4, kind: input, shape index: {}]
  %s5 = inlined_call_operand.vmem [shape: f32[4,1], index: 5, kind: input, shape index: {}]
  %s6 = inlined_call_operand.vmem [shape: f32[512,64], index: 6, kind: input, shape index: {}]
  %s7 = inlined_call_operand.vmem [shape: f32[1,64], index: 7, kind: input, shape index: {}]
  %s8 = inlined_call_operand.vmem [shape: f32[64,16], index: 8, kind: input, shape index: {}]
  %s9 = inlined_call_operand.vmem [shape: f32[1,16], index: 9, kind: input, shape index: {}]
  %s10 = inlined_call_operand.vmem [shape: f32[48,32], index: 10, kind: input, shape index: {}]
  %s11 = inlined_call_operand.vmem [shape: f32[1,32], index: 11, kind: input, shape index: {}]
  %s12 = inlined_call_operand.vmem [shape: f32[32,8], index: 12, kind: input, shape index: {}]
  %s13 = inlined_call_operand.vmem [shape: f32[1,8], index: 13, kind: input, shape index: {}]
  %s14 = inlined_call_operand.vmem [shape: f32[2,128], index: 14, kind: output, shape index: {}]
  %s15 = sld [smem:[#allocation0]]
  $region66: #{styletransfer_forward.1} parent=0
    _
  %s17 = ssub.s32 1, %s15
  %s18 = scalar_select 0, %s17, %s15
  // Predicated region
  $region2: #{styletransfer_forward.1} parent=0 // pred_check
    _
  $region3: #{styletransfer_forward.1} parent=0 // pred_check_branch
    %20 = sbr.rel (0) target = $region5
  $region4: #{styletransfer_forward.1} parent=0 // pred_region
    _
  $region5: #{styletransfer_forward.1} parent=0 // pred_fallthru
    _
  // Predicated region
  $region6: #{styletransfer_forward.1} parent=0 // pred_check
    _
  $region7: #{styletransfer_forward.1} parent=0 // pred_check_branch
    %22 = sbr.rel (0) target = $region9
  $region8: #{styletransfer_forward.1} parent=0 // pred_region
    _
  $region9: #{styletransfer_forward.1} parent=0 // pred_fallthru
    _
  // Predicated region
  $region10: #{styletransfer_forward.1} parent=0 // pred_check
    _
  $region11: #{styletransfer_forward.1} parent=0 // pred_check_branch
    %24 = sbr.rel (0) target = $region13
  $region12: #{styletransfer_forward.1} parent=0 // pred_region
    _
  $region13: #{styletransfer_forward.1} parent=0 // pred_fallthru
    _
  // Predicated region
  $region14: #{styletransfer_forward.1} parent=0 // pred_check
    _
  $region15: #{styletransfer_forward.1} parent=0 // pred_check_branch
    %26 = sbr.rel (0) target = $region17
  $region16: #{styletransfer_forward.1} parent=0 // pred_region
    _
  $region17: #{styletransfer_forward.1} parent=0 // pred_fallthru
    _
  // Predicated region
  $region18: #{styletransfer_forward.1} parent=0 // pred_check
    _
  $region19: #{styletransfer_forward.1} parent=0 // pred_check_branch
    %28 = sbr.rel (0) target = $region21
  $region20: #{styletransfer_forward.1} parent=0 // pred_region
    _
  $region21: #{styletransfer_forward.1} parent=0 // pred_fallthru
    _
  // Predicated region
  $region22: #{styletransfer_forward.1} parent=0 // pred_check
    _
  $region23: #{styletransfer_forward.1} parent=0 // pred_check_branch
    %30 = sbr.rel (0) target = $region25
  $region24: #{styletransfer_forward.1} parent=0 // pred_region
    _
  $region25: #{styletransfer_forward.1} parent=0 // pred_fallthru
    _
  // Predicated region
  $region26: #{styletransfer_forward.1} parent=0 // pred_check
    _
  $region27: #{styletransfer_forward.1} parent=0 // pred_check_branch
    %32 = sbr.rel (0) target = $region29
  $region28: #{styletransfer_forward.1} parent=0 // pred_region
    _
  $region29: #{styletransfer_forward.1} parent=0 // pred_fallthru
    _
  // Predicated region
  $region30: #{styletransfer_forward.1} parent=0 // pred_check
    _
  $region31: #{styletransfer_forward.1} parent=0 // pred_check_branch
    %34 = sbr.rel (0) target = $region33
  $region32: #{styletransfer_forward.1} parent=0 // pred_region
    _
  $region33: #{styletransfer_forward.1} parent=0 // pred_fallthru
    _
  // Predicated region
  $region34: #{styletransfer_forward.1} parent=0 // pred_check
    _
  $region35: #{styletransfer_forward.1} parent=0 // pred_check_branch
    %36 = sbr.rel (0) target = $region37
  $region36: #{styletransfer_forward.1} parent=0 // pred_region
    _
  $region37: #{styletransfer_forward.1} parent=0 // pred_fallthru
    _
  // Predicated region
  $region38: #{styletransfer_forward.1} parent=0 // pred_check
    _
  $region39: #{styletransfer_forward.1} parent=0 // pred_check_branch
    %38 = sbr.rel (0) target = $region41
  $region40: #{styletransfer_forward.1} parent=0 // pred_region
    _
  $region41: #{styletransfer_forward.1} parent=0 // pred_fallthru
    _
  // Predicated region
  $region42: #{styletransfer_forward.1} parent=0 // pred_check
    _
  $region43: #{styletransfer_forward.1} parent=0 // pred_check_branch
    %40 = sbr.rel (0) target = $region45
  $region44: #{styletransfer_forward.1} parent=0 // pred_region
    _
  $region45: #{styletransfer_forward.1} parent=0 // pred_fallthru
    _
  // Predicated region
  $region46: #{styletransfer_forward.1} parent=0 // pred_check
    _
  $region47: #{styletransfer_forward.1} parent=0 // pred_check_branch
    %42 = sbr.rel (0) target = $region49
  $region48: #{styletransfer_forward.1} parent=0 // pred_region
    _
  $region49: #{styletransfer_forward.1} parent=0 // pred_fallthru
    _
  // Predicated region
  $region50: #{styletransfer_forward.1} parent=0 // pred_check
    _
  $region51: #{styletransfer_forward.1} parent=0 // pred_check_branch
    %44 = sbr.rel (0) target = $region53
  $region52: #{styletransfer_forward.1} parent=0 // pred_region
    _
  $region53: #{styletransfer_forward.1} parent=0 // pred_fallthru
    _
  // Predicated region
  $region54: #{styletransfer_forward.1} parent=0 // pred_check
    _
  $region55: #{styletransfer_forward.1} parent=0 // pred_check_branch
    %46 = sbr.rel (0) target = $region57
  $region56: #{styletransfer_forward.1} parent=0 // pred_region
    _
  $region57: #{styletransfer_forward.1} parent=0 // pred_fallthru
    _
  %v47 = vld [vmem:[%s2] sm:$0xf]
  %v48 = vld [vmem:[%s0] sm:$0xff]
  %v49 = vld [vmem:[%s0 + $0x8] sm:$0xff]
  %v50 = vld [vmem:[%s0 + $0x10] sm:$0x3]
  %v51 = vld [vmem:[%s3] sm:$0xf]
  %53 = vset.pattern.permute.xlu0 0
  %54 = vperm.xlu0 %53, %v51
  %v55 = vpop.permute.xlu0 %54
  %vm57 = vcmask 146432
  %v59 = vsel %vm57, %v47, 0
  %vm61 = vcmask 1041408
  %v63 = vsel %vm61, %v50, 0
  %65 = vmatprep.subr.mxu0 0.0
  %66 = vmatpush1.msra.mxu0 %v48
  %67 = vmatprep.subr.mxu0 0.0
  %68 = vmatpush1.msra.mxu0 %v49
  %69 = vmatprep.subr.mxu0 0.0
  %70 = vmatpush1.msra.mxu0 %v63
  %71 = vmatprep.subr.mxu0 0.0
  %72 = vmatpush1.msra.mxu0 0.0
  %73 = vmatprep.subr.mxu0 0.0
  %74 = vmatpush1.msra.mxu0 0.0
  %75 = vmatprep.subr.mxu0 0.0
  %76 = vmatpush1.msra.mxu0 0.0
  %77 = vmatprep.subr.mxu0 0.0
  %78 = vmatpush1.msra.mxu0 0.0
  %79 = vmatprep.subr.mxu0 0.0
  %80 = vmatpush1.msra.mxu0 0.0
  %81 = vmatprep.subr.mxu0 0.0
  %82 = vmatpush1.msra.mxu0 0.0
  %83 = vmatprep.subr.mxu0 0.0
  %84 = vmatpush1.msra.mxu0 0.0
  %85 = vmatprep.subr.mxu0 0.0
  %86 = vmatpush1.msra.mxu0 0.0
  %87 = vmatprep.subr.mxu0 0.0
  %88 = vmatpush1.msra.mxu0 0.0
  %89 = vmatprep.subr.mxu0 0.0
  %90 = vmatpush1.msra.mxu0 0.0
  %91 = vmatprep.subr.mxu0 0.0
  %92 = vmatpush1.msra.mxu0 0.0
  %93 = vmatprep.subr.mxu0 0.0
  %94 = vmatpush1.msra.mxu0 0.0
  %95 = vmatprep.subr.mxu0 0.0
  %96 = vmatpush1.msra.mxu0 0.0
  %97 = vmatprep.subr.mxu0 0.0
  %98 = vmatpush1.msra.mxu0 0.0
  %99 = vmatprep.subr.mxu0 0.0
  %100 = vmatpush1.msra.mxu0 0.0
  %101 = vmatprep.subr.mxu0 0.0
  %102 = vmatpush1.msra.mxu0 0.0
  %103 = vmatprep.subr.mxu0 0.0
  %104 = vmatpush1.msra.mxu0 0.0
  %105 = vmatprep.subr.mxu0 0.0
  %106 = vmatpush1.msra.mxu0 0.0
  %107 = vmatprep.subr.mxu0 0.0
  %108 = vmatpush1.msra.mxu0 0.0
  %109 = vmatprep.subr.mxu0 0.0
  %110 = vmatpush1.msra.mxu0 0.0
  %111 = vmatprep.subr.mxu0 0.0
  %112 = vmatpush1.msra.mxu0 0.0
  %113 = vmatprep.subr.mxu0 0.0
  %114 = vmatpush1.msra.mxu0 0.0
  %115 = vmatprep.subr.mxu0 0.0
  %116 = vmatpush1.msra.mxu0 0.0
  %117 = vmatprep.subr.mxu0 0.0
  %118 = vmatpush1.msra.mxu0 0.0
  %119 = vmatprep.subr.mxu0 0.0
  %120 = vmatpush1.msra.mxu0 0.0
  %121 = vmatprep.subr.mxu0 0.0
  %122 = vmatpush1.msra.mxu0 0.0
  %123 = vmatprep.subr.mxu0 0.0
  %124 = vmatpush1.msra.mxu0 0.0
  %125 = vmatprep.subr.mxu0 0.0
  %126 = vmatpush1.msra.mxu0 0.0
  %127 = vmatprep.subr.mxu0 0.0
  %128 = vmatpush1.msra.mxu0 0.0
  %129 = vmatprep.mubr.f32.mxu0 0.0
  %130 = vmatmul.mubr.f32.gmra.mrb[0].mxu0 %v59
  %v131 = vpop.f32.mrb[0].mxu0
  %v132 = vadd.f32 %v55, %v131
  %v133 = vpop.f32.mrb[0].mxu0
  %134 = vdwg.mxu0
  %v135 = vmax.f32 %v132, 0.0
  %v136 = vld [vmem:[%s4] sm:$0xf]
  %s137 = scalar_lea.vmem %s0, 24
  %v138 = vld [vmem:[%s137] sm:$0xff]
  %v139 = vld [vmem:[%s137 + $0x8] sm:$0xff]
  %v140 = vld [vmem:[%s137 + $0x10] sm:$0x3]
  %v141 = vld [vmem:[%s5] sm:$0xf]
  %143 = vset.pattern.permute.xlu0 0
  %144 = vperm.xlu0 %143, %v141
  %v145 = vpop.permute.xlu0 %144
  %v148 = vsel %vm57, %v136, 0
  %v151 = vsel %vm61, %v140, 0
  %153 = vmatprep.subr.mxu0 0.0
  %154 = vmatpush1.msra.mxu0 %v138
  %155 = vmatprep.subr.mxu0 0.0
  %156 = vmatpush1.msra.mxu0 %v139
  %157 = vmatprep.subr.mxu0 0.0
  %158 = vmatpush1.msra.mxu0 %v151
  %159 = vmatprep.subr.mxu0 0.0
  %160 = vmatpush1.msra.mxu0 0.0
  %161 = vmatprep.subr.mxu0 0.0
  %162 = vmatpush1.msra.mxu0 0.0
  %163 = vmatprep.subr.mxu0 0.0
  %164 = vmatpush1.msra.mxu0 0.0
  %165 = vmatprep.subr.mxu0 0.0
  %166 = vmatpush1.msra.mxu0 0.0
  %167 = vmatprep.subr.mxu0 0.0
  %168 = vmatpush1.msra.mxu0 0.0
  %169 = vmatprep.subr.mxu0 0.0
  %170 = vmatpush1.msra.mxu0 0.0
  %171 = vmatprep.subr.mxu0 0.0
  %172 = vmatpush1.msra.mxu0 0.0
  %173 = vmatprep.subr.mxu0 0.0
  %174 = vmatpush1.msra.mxu0 0.0
  %175 = vmatprep.subr.mxu0 0.0
  %176 = vmatpush1.msra.mxu0 0.0
  %177 = vmatprep.subr.mxu0 0.0
  %178 = vmatpush1.msra.mxu0 0.0
  %179 = vmatprep.subr.mxu0 0.0
  %180 = vmatpush1.msra.mxu0 0.0
  %181 = vmatprep.subr.mxu0 0.0
  %182 = vmatpush1.msra.mxu0 0.0
  %183 = vmatprep.subr.mxu0 0.0
  %184 = vmatpush1.msra.mxu0 0.0
  %185 = vmatprep.subr.mxu0 0.0
  %186 = vmatpush1.msra.mxu0 0.0
  %187 = vmatprep.subr.mxu0 0.0
  %188 = vmatpush1.msra.mxu0 0.0
  %189 = vmatprep.subr.mxu0 0.0
  %190 = vmatpush1.msra.mxu0 0.0
  %191 = vmatprep.subr.mxu0 0.0
  %192 = vmatpush1.msra.mxu0 0.0
  %193 = vmatprep.subr.mxu0 0.0
  %194 = vmatpush1.msra.mxu0 0.0
  %195 = vmatprep.subr.mxu0 0.0
  %196 = vmatpush1.msra.mxu0 0.0
  %197 = vmatprep.subr.mxu0 0.0
  %198 = vmatpush1.msra.mxu0 0.0
  %199 = vmatprep.subr.mxu0 0.0
  %200 = vmatpush1.msra.mxu0 0.0
  %201 = vmatprep.subr.mxu0 0.0
  %202 = vmatpush1.msra.mxu0 0.0
  %203 = vmatprep.subr.mxu0 0.0
  %204 = vmatpush1.msra.mxu0 0.0
  %205 = vmatprep.subr.mxu0 0.0
  %206 = vmatpush1.msra.mxu0 0.0
  %207 = vmatprep.subr.mxu0 0.0
  %208 = vmatpush1.msra.mxu0 0.0
  %209 = vmatprep.subr.mxu0 0.0
  %210 = vmatpush1.msra.mxu0 0.0
  %211 = vmatprep.subr.mxu0 0.0
  %212 = vmatpush1.msra.mxu0 0.0
  %213 = vmatprep.subr.mxu0 0.0
  %214 = vmatpush1.msra.mxu0 0.0
  %215 = vmatprep.subr.mxu0 0.0
  %216 = vmatpush1.msra.mxu0 0.0
  %217 = vmatprep.mubr.f32.mxu0 0.0
  %218 = vmatmul.mubr.f32.gmra.mrb[0].mxu0 %v148
  %v219 = vpop.f32.mrb[0].mxu0
  %v220 = vadd.f32 %v145, %v219
  %v221 = vpop.f32.mrb[0].mxu0
  %222 = vdwg.mxu0
  %v223 = vmax.f32 %v220, 0.0
  %vm224 = vcmask 516096
  %225 = vst.msk [vmem:[#allocation2] sm:$0x1] %vm224, %v135
  %v228 = vunpack.c.l.s4 1983009808
  %v229 = vunpack.c.0.s8 %v228
  %v230 = vlaneseq
  %v231 = vshrl.u32 %v230, 7
  %v232 = vsub.s32 %v229, %v231
  %v233 = vrot.slane %v135, %v232
  %234 = vrot.lane.b32.xlu0 %v233, 64
  %v235 = vpop.permute.xlu0 %234
  %237 = vst.msk [vmem:[#allocation2 + $0x1] sm:$0x1] %vm224, %v235
  %v238 = vrot.slane %v233, 7
  %v239 = vrot.slane %v238, 2
  %240 = vrot.lane.b32.xlu0 %v239, 64
  %v241 = vpop.permute.xlu0 %240
  %vm243 = vcmask 1040896
  %244 = vst.msk [vmem:[#allocation2] sm:$0x1] %vm243, %v241
  %246 = vst.msk [vmem:[#allocation2 + $0x1] sm:$0x1] %vm243, %v239
  %v247 = vcombine.high %v233, %v233
  %249 = vst.msk [vmem:[#allocation2 + $0x2] sm:$0x1] %vm224, %v247
  %250 = vrot.lane.b32.xlu0 %v247, 64
  %v251 = vpop.permute.xlu0 %250
  %253 = vst.msk [vmem:[#allocation2 + $0x3] sm:$0x1] %vm224, %v251
  %v254 = vrot.slane %v247, 7
  %v255 = vrot.slane %v254, 2
  %256 = vrot.lane.b32.xlu0 %v255, 64
  %v257 = vpop.permute.xlu0 %256
  %259 = vst.msk [vmem:[#allocation2 + $0x2] sm:$0x1] %vm243, %v257
  %261 = vst.msk [vmem:[#allocation2 + $0x3] sm:$0x1] %vm243, %v255
  %262 = vst.msk [vmem:[#allocation2 + $0x4] sm:$0x1] %vm224, %v223
  %v265 = vunpack.c.l.s4 1983009808
  %v266 = vunpack.c.0.s8 %v265
  %v267 = vlaneseq
  %v268 = vshrl.u32 %v267, 7
  %v269 = vsub.s32 %v266, %v268
  %v270 = vrot.slane %v223, %v269
  %271 = vrot.lane.b32.xlu0 %v270, 64
  %v272 = vpop.permute.xlu0 %271
  %274 = vst.msk [vmem:[#allocation2 + $0x5] sm:$0x1] %vm224, %v272
  %v275 = vrot.slane %v270, 7
  %v276 = vrot.slane %v275, 2
  %277 = vrot.lane.b32.xlu0 %v276, 64
  %v278 = vpop.permute.xlu0 %277
  %280 = vst.msk [vmem:[#allocation2 + $0x4] sm:$0x1] %vm243, %v278
  %282 = vst.msk [vmem:[#allocation2 + $0x5] sm:$0x1] %vm243, %v276
  %v283 = vcombine.high %v270, %v270
  %285 = vst.msk [vmem:[#allocation2 + $0x6] sm:$0x1] %vm224, %v283
  %286 = vrot.lane.b32.xlu0 %v283, 64
  %v287 = vpop.permute.xlu0 %286
  %289 = vst.msk [vmem:[#allocation2 + $0x7] sm:$0x1] %vm224, %v287
  %v290 = vrot.slane %v283, 7
  %v291 = vrot.slane %v290, 2
  %292 = vrot.lane.b32.xlu0 %v291, 64
  %v293 = vpop.permute.xlu0 %292
  %295 = vst.msk [vmem:[#allocation2 + $0x6] sm:$0x1] %vm243, %v293
  %297 = vst.msk [vmem:[#allocation2 + $0x7] sm:$0x1] %vm243, %v291
  %v298 = vld [vmem:[#allocation2] sm:$0xff]
  %v299 = vld [vmem:[%s6] sm:$0xff]
  %v300 = vld [vmem:[%s6 + $0x8] sm:$0xff]
  %v301 = vld [vmem:[%s6 + $0x10] sm:$0xff]
  %v302 = vld [vmem:[%s6 + $0x18] sm:$0xff]
  %v303 = vld [vmem:[%s6 + $0x20] sm:$0xff]
  %v304 = vld [vmem:[%s6 + $0x28] sm:$0xff]
  %v305 = vld [vmem:[%s6 + $0x30] sm:$0xff]
  %v306 = vld [vmem:[%s6 + $0x38] sm:$0xff]
  %v307 = vld [vmem:[%s6 + $0x40] sm:$0xff]
  %v308 = vld [vmem:[%s6 + $0x48] sm:$0xff]
  %v309 = vld [vmem:[%s6 + $0x50] sm:$0xff]
  %v310 = vld [vmem:[%s6 + $0x58] sm:$0xff]
  %v311 = vld [vmem:[%s6 + $0x60] sm:$0xff]
  %v312 = vld [vmem:[%s6 + $0x68] sm:$0xff]
  %v313 = vld [vmem:[%s6 + $0x70] sm:$0xff]
  %v314 = vld [vmem:[%s6 + $0x78] sm:$0xff]
  %v315 = vld [vmem:[%s6 + $0x80] sm:$0xff]
  %v316 = vld [vmem:[%s6 + $0x88] sm:$0xff]
  %v317 = vld [vmem:[%s6 + $0x90] sm:$0xff]
  %v318 = vld [vmem:[%s6 + $0x98] sm:$0xff]
  %v319 = vld [vmem:[%s6 + $0xa0] sm:$0xff]
  %v320 = vld [vmem:[%s6 + $0xa8] sm:$0xff]
  %v321 = vld [vmem:[%s6 + $0xb0] sm:$0xff]
  %v322 = vld [vmem:[%s6 + $0xb8] sm:$0xff]
  %v323 = vld [vmem:[%s6 + $0xc0] sm:$0xff]
  %v324 = vld [vmem:[%s6 + $0xc8] sm:$0xff]
  %v325 = vld [vmem:[%s6 + $0xd0] sm:$0xff]
  %v326 = vld [vmem:[%s6 + $0xd8] sm:$0xff]
  %v327 = vld [vmem:[%s6 + $0xe0] sm:$0xff]
  %v328 = vld [vmem:[%s6 + $0xe8] sm:$0xff]
  %v329 = vld [vmem:[%s6 + $0xf0] sm:$0xff]
  %v330 = vld [vmem:[%s6 + $0xf8] sm:$0xff]
  %v331 = vld [vmem:[%s6 + $0x100] sm:$0xff]
  %v332 = vld [vmem:[%s6 + $0x108] sm:$0xff]
  %v333 = vld [vmem:[%s6 + $0x110] sm:$0xff]
  %v334 = vld [vmem:[%s6 + $0x118] sm:$0xff]
  %v335 = vld [vmem:[%s6 + $0x120] sm:$0xff]
  %v336 = vld [vmem:[%s6 + $0x128] sm:$0xff]
  %v337 = vld [vmem:[%s6 + $0x130] sm:$0xff]
  %v338 = vld [vmem:[%s6 + $0x138] sm:$0xff]
  %v339 = vld [vmem:[%s6 + $0x140] sm:$0xff]
  %v340 = vld [vmem:[%s6 + $0x148] sm:$0xff]
  %v341 = vld [vmem:[%s6 + $0x150] sm:$0xff]
  %v342 = vld [vmem:[%s6 + $0x158] sm:$0xff]
  %v343 = vld [vmem:[%s6 + $0x160] sm:$0xff]
  %v344 = vld [vmem:[%s6 + $0x168] sm:$0xff]
  %v345 = vld [vmem:[%s6 + $0x170] sm:$0xff]
  %v346 = vld [vmem:[%s6 + $0x178] sm:$0xff]
  %v347 = vld [vmem:[%s6 + $0x180] sm:$0xff]
  %v348 = vld [vmem:[%s6 + $0x188] sm:$0xff]
  %v349 = vld [vmem:[%s6 + $0x190] sm:$0xff]
  %v350 = vld [vmem:[%s6 + $0x198] sm:$0xff]
  %v351 = vld [vmem:[%s6 + $0x1a0] sm:$0xff]
  %v352 = vld [vmem:[%s6 + $0x1a8] sm:$0xff]
  %v353 = vld [vmem:[%s6 + $0x1b0] sm:$0xff]
  %v354 = vld [vmem:[%s6 + $0x1b8] sm:$0xff]
  %v355 = vld [vmem:[%s6 + $0x1c0] sm:$0xff]
  %v356 = vld [vmem:[%s6 + $0x1c8] sm:$0xff]
  %v357 = vld [vmem:[%s6 + $0x1d0] sm:$0xff]
  %v358 = vld [vmem:[%s6 + $0x1d8] sm:$0xff]
  %v359 = vld [vmem:[%s6 + $0x1e0] sm:$0xff]
  %v360 = vld [vmem:[%s6 + $0x1e8] sm:$0xff]
  %v361 = vld [vmem:[%s6 + $0x1f0] sm:$0xff]
  %v362 = vld [vmem:[%s6 + $0x1f8] sm:$0xff]
  %v363 = vld [vmem:[%s7] sm:$0x1]
  %v365 = vlaneseq
  %v366 = vshrl.u32 %v365, 7
  %v367 = vsub.s32 0, %v366
  %v368 = vrot.slane %v363, %v367
  %v371 = vcombine.high %v298, %v298
  %v373 = vunpack.c.l.s4 1983009808
  %v374 = vunpack.c.0.s8 %v373
  %v375 = vlaneseq
  %v376 = vshrl.u32 %v375, 7
  %v377 = vsub.s32 %v374, %v376
  %v378 = vrot.slane %v298, %v377
  %v380 = vunpack.c.l.s4 1983009808
  %v381 = vunpack.c.0.s8 %v380
  %v382 = vlaneseq
  %v383 = vshrl.u32 %v382, 7
  %v384 = vsub.s32 %v381, %v383
  %v385 = vrot.slane %v371, %v384
  %v386 = vcombine.high %v378, %v378
  %v387 = vcombine.high %v385, %v385
  %392 = vmatprep.subr.mxu0 0.0
  %393 = vmatpush1.msra.mxu0 %v299
  %394 = vmatprep.subr.mxu0 0.0
  %395 = vmatpush1.msra.mxu0 %v300
  %396 = vmatprep.subr.mxu0 0.0
  %397 = vmatpush1.msra.mxu0 %v301
  %398 = vmatprep.subr.mxu0 0.0
  %399 = vmatpush1.msra.mxu0 %v302
  %400 = vmatprep.subr.mxu0 0.0
  %401 = vmatpush1.msra.mxu0 %v303
  %402 = vmatprep.subr.mxu0 0.0
  %403 = vmatpush1.msra.mxu0 %v304
  %404 = vmatprep.subr.mxu0 0.0
  %405 = vmatpush1.msra.mxu0 %v305
  %406 = vmatprep.subr.mxu0 0.0
  %407 = vmatpush1.msra.mxu0 %v306
  %408 = vmatprep.subr.mxu0 0.0
  %409 = vmatpush1.msra.mxu0 %v307
  %410 = vmatprep.subr.mxu0 0.0
  %411 = vmatpush1.msra.mxu0 %v308
  %412 = vmatprep.subr.mxu0 0.0
  %413 = vmatpush1.msra.mxu0 %v309
  %414 = vmatprep.subr.mxu0 0.0
  %415 = vmatpush1.msra.mxu0 %v310
  %416 = vmatprep.subr.mxu0 0.0
  %417 = vmatpush1.msra.mxu0 %v311
  %418 = vmatprep.subr.mxu0 0.0
  %419 = vmatpush1.msra.mxu0 %v312
  %420 = vmatprep.subr.mxu0 0.0
  %421 = vmatpush1.msra.mxu0 %v313
  %422 = vmatprep.subr.mxu0 0.0
  %423 = vmatpush1.msra.mxu0 %v314
  %424 = vmatprep.subr.mxu0 0.0
  %425 = vmatpush1.msra.mxu0 %v315
  %426 = vmatprep.subr.mxu0 0.0
  %427 = vmatpush1.msra.mxu0 %v316
  %428 = vmatprep.subr.mxu0 0.0
  %429 = vmatpush1.msra.mxu0 %v317
  %430 = vmatprep.subr.mxu0 0.0
  %431 = vmatpush1.msra.mxu0 %v318
  %432 = vmatprep.subr.mxu0 0.0
  %433 = vmatpush1.msra.mxu0 %v319
  %434 = vmatprep.subr.mxu0 0.0
  %435 = vmatpush1.msra.mxu0 %v320
  %436 = vmatprep.subr.mxu0 0.0
  %437 = vmatpush1.msra.mxu0 %v321
  %438 = vmatprep.subr.mxu0 0.0
  %439 = vmatpush1.msra.mxu0 %v322
  %440 = vmatprep.subr.mxu0 0.0
  %441 = vmatpush1.msra.mxu0 %v323
  %442 = vmatprep.subr.mxu0 0.0
  %443 = vmatpush1.msra.mxu0 %v324
  %444 = vmatprep.subr.mxu0 0.0
  %445 = vmatpush1.msra.mxu0 %v325
  %446 = vmatprep.subr.mxu0 0.0
  %447 = vmatpush1.msra.mxu0 %v326
  %448 = vmatprep.subr.mxu0 0.0
  %449 = vmatpush1.msra.mxu0 %v327
  %450 = vmatprep.subr.mxu0 0.0
  %451 = vmatpush1.msra.mxu0 %v328
  %452 = vmatprep.subr.mxu0 0.0
  %453 = vmatpush1.msra.mxu0 %v329
  %454 = vmatprep.subr.mxu0 0.0
  %455 = vmatpush1.msra.mxu0 %v330
  %456 = vmatprep.mubr.f32.mxu0 %v386
  %457 = vmatmul.mubr.f32.gmra.mrb[0].mxu0 %v378
  %v458 = vpop.f32.mrb[0].mxu0
  %v459 = vadd.f32 %v368, %v458
  %v460 = vpop.f32.mrb[0].mxu0
  %461 = vdwg.mxu0
  %462 = vmatprep.subr.mxu0 0.0
  %463 = vmatpush1.msra.mxu0 %v331
  %464 = vmatprep.subr.mxu0 0.0
  %465 = vmatpush1.msra.mxu0 %v332
  %466 = vmatprep.subr.mxu0 0.0
  %467 = vmatpush1.msra.mxu0 %v333
  %468 = vmatprep.subr.mxu0 0.0
  %469 = vmatpush1.msra.mxu0 %v334
  %470 = vmatprep.subr.mxu0 0.0
  %471 = vmatpush1.msra.mxu0 %v335
  %472 = vmatprep.subr.mxu0 0.0
  %473 = vmatpush1.msra.mxu0 %v336
  %474 = vmatprep.subr.mxu0 0.0
  %475 = vmatpush1.msra.mxu0 %v337
  %476 = vmatprep.subr.mxu0 0.0
  %477 = vmatpush1.msra.mxu0 %v338
  %478 = vmatprep.subr.mxu0 0.0
  %479 = vmatpush1.msra.mxu0 %v339
  %480 = vmatprep.subr.mxu0 0.0
  %481 = vmatpush1.msra.mxu0 %v340
  %482 = vmatprep.subr.mxu0 0.0
  %483 = vmatpush1.msra.mxu0 %v341
  %484 = vmatprep.subr.mxu0 0.0
  %485 = vmatpush1.msra.mxu0 %v342
  %486 = vmatprep.subr.mxu0 0.0
  %487 = vmatpush1.msra.mxu0 %v343
  %488 = vmatprep.subr.mxu0 0.0
  %489 = vmatpush1.msra.mxu0 %v344
  %490 = vmatprep.subr.mxu0 0.0
  %491 = vmatpush1.msra.mxu0 %v345
  %492 = vmatprep.subr.mxu0 0.0
  %493 = vmatpush1.msra.mxu0 %v346
  %494 = vmatprep.subr.mxu0 0.0
  %495 = vmatpush1.msra.mxu0 %v347
  %496 = vmatprep.subr.mxu0 0.0
  %497 = vmatpush1.msra.mxu0 %v348
  %498 = vmatprep.subr.mxu0 0.0
  %499 = vmatpush1.msra.mxu0 %v349
  %500 = vmatprep.subr.mxu0 0.0
  %501 = vmatpush1.msra.mxu0 %v350
  %502 = vmatprep.subr.mxu0 0.0
  %503 = vmatpush1.msra.mxu0 %v351
  %504 = vmatprep.subr.mxu0 0.0
  %505 = vmatpush1.msra.mxu0 %v352
  %506 = vmatprep.subr.mxu0 0.0
  %507 = vmatpush1.msra.mxu0 %v353
  %508 = vmatprep.subr.mxu0 0.0
  %509 = vmatpush1.msra.mxu0 %v354
  %510 = vmatprep.subr.mxu0 0.0
  %511 = vmatpush1.msra.mxu0 %v355
  %512 = vmatprep.subr.mxu0 0.0
  %513 = vmatpush1.msra.mxu0 %v356
  %514 = vmatprep.subr.mxu0 0.0
  %515 = vmatpush1.msra.mxu0 %v357
  %516 = vmatprep.subr.mxu0 0.0
  %517 = vmatpush1.msra.mxu0 %v358
  %518 = vmatprep.subr.mxu0 0.0
  %519 = vmatpush1.msra.mxu0 %v359
  %520 = vmatprep.subr.mxu0 0.0
  %521 = vmatpush1.msra.mxu0 %v360
  %522 = vmatprep.subr.mxu0 0.0
  %523 = vmatpush1.msra.mxu0 %v361
  %524 = vmatprep.subr.mxu0 0.0
  %525 = vmatpush1.msra.mxu0 %v362
  %526 = vmatprep.mubr.f32.mxu0 %v387
  %527 = vmatmul.mubr.f32.gmra.mrb[0].mxu0 %v385
  %v528 = vpop.f32.mrb[0].mxu0
  %v529 = vadd.f32 %v459, %v528
  %v530 = vpop.f32.mrb[0].mxu0
  %531 = vdwg.mxu0
  %v532 = vmax.f32 %v529, 0.0
  %v533 = vld [vmem:[%s8] sm:$0xff]
  %v534 = vld [vmem:[%s8 + $0x8] sm:$0xff]
  %v535 = vld [vmem:[%s8 + $0x10] sm:$0xff]
  %v536 = vld [vmem:[%s8 + $0x18] sm:$0xff]
  %v537 = vld [vmem:[%s8 + $0x20] sm:$0xff]
  %v538 = vld [vmem:[%s8 + $0x28] sm:$0xff]
  %v539 = vld [vmem:[%s8 + $0x30] sm:$0xff]
  %v540 = vld [vmem:[%s8 + $0x38] sm:$0xff]
  %v541 = vld [vmem:[%s9] sm:$0x1]
  %v543 = vlaneseq
  %v544 = vshrl.u32 %v543, 7
  %v545 = vsub.s32 0, %v544
  %v546 = vrot.slane %v541, %v545
  %vm548 = vcmask 523264
  %v550 = vsel %vm548, %v532, 0
  %552 = vmatprep.subr.mxu0 0.0
  %553 = vmatpush1.msra.mxu0 %v533
  %554 = vmatprep.subr.mxu0 0.0
  %555 = vmatpush1.msra.mxu0 %v534
  %556 = vmatprep.subr.mxu0 0.0
  %557 = vmatpush1.msra.mxu0 %v535
  %558 = vmatprep.subr.mxu0 0.0
  %559 = vmatpush1.msra.mxu0 %v536
  %560 = vmatprep.subr.mxu0 0.0
  %561 = vmatpush1.msra.mxu0 %v537
  %562 = vmatprep.subr.mxu0 0.0
  %563 = vmatpush1.msra.mxu0 %v538
  %564 = vmatprep.subr.mxu0 0.0
  %565 = vmatpush1.msra.mxu0 %v539
  %566 = vmatprep.subr.mxu0 0.0
  %567 = vmatpush1.msra.mxu0 %v540
  %568 = vmatprep.subr.mxu0 0.0
  %569 = vmatpush1.msra.mxu0 0.0
  %570 = vmatprep.subr.mxu0 0.0
  %571 = vmatpush1.msra.mxu0 0.0
  %572 = vmatprep.subr.mxu0 0.0
  %573 = vmatpush1.msra.mxu0 0.0
  %574 = vmatprep.subr.mxu0 0.0
  %575 = vmatpush1.msra.mxu0 0.0
  %576 = vmatprep.subr.mxu0 0.0
  %577 = vmatpush1.msra.mxu0 0.0
  %578 = vmatprep.subr.mxu0 0.0
  %579 = vmatpush1.msra.mxu0 0.0
  %580 = vmatprep.subr.mxu0 0.0
  %581 = vmatpush1.msra.mxu0 0.0
  %582 = vmatprep.subr.mxu0 0.0
  %583 = vmatpush1.msra.mxu0 0.0
  %584 = vmatprep.subr.mxu0 0.0
  %585 = vmatpush1.msra.mxu0 0.0
  %586 = vmatprep.subr.mxu0 0.0
  %587 = vmatpush1.msra.mxu0 0.0
  %588 = vmatprep.subr.mxu0 0.0
  %589 = vmatpush1.msra.mxu0 0.0
  %590 = vmatprep.subr.mxu0 0.0
  %591 = vmatpush1.msra.mxu0 0.0
  %592 = vmatprep.subr.mxu0 0.0
  %593 = vmatpush1.msra.mxu0 0.0
  %594 = vmatprep.subr.mxu0 0.0
  %595 = vmatpush1.msra.mxu0 0.0
  %596 = vmatprep.subr.mxu0 0.0
  %597 = vmatpush1.msra.mxu0 0.0
  %598 = vmatprep.subr.mxu0 0.0
  %599 = vmatpush1.msra.mxu0 0.0
  %600 = vmatprep.subr.mxu0 0.0
  %601 = vmatpush1.msra.mxu0 0.0
  %602 = vmatprep.subr.mxu0 0.0
  %603 = vmatpush1.msra.mxu0 0.0
  %604 = vmatprep.subr.mxu0 0.0
  %605 = vmatpush1.msra.mxu0 0.0
  %606 = vmatprep.subr.mxu0 0.0
  %607 = vmatpush1.msra.mxu0 0.0
  %608 = vmatprep.subr.mxu0 0.0
  %609 = vmatpush1.msra.mxu0 0.0
  %610 = vmatprep.subr.mxu0 0.0
  %611 = vmatpush1.msra.mxu0 0.0
  %612 = vmatprep.subr.mxu0 0.0
  %613 = vmatpush1.msra.mxu0 0.0
  %614 = vmatprep.subr.mxu0 0.0
  %615 = vmatpush1.msra.mxu0 0.0
  %616 = vmatprep.mubr.f32.mxu0 0.0
  %617 = vmatmul.mubr.f32.gmra.mrb[0].mxu0 %v550
  %v618 = vpop.f32.mrb[0].mxu0
  %v619 = vadd.f32 %v546, %v618
  %v620 = vpop.f32.mrb[0].mxu0
  %621 = vdwg.mxu0
  %v622 = vmul.f32 %v619, 1e-05
  %v623 = vxor.u32 %v622, 2147483648
  %v624 = vmul.f32 %v623, 1.442695
  %v625 = vpow.pop %v624
  %v626 = vadd.f32 %v625, 1.0
  %v627 = vrcp.pop %v626
  %v628 = vmul.f32 1.0, %v627
  %v629 = vmul.f32 %v628, 40.0
  %v630 = vadd.f32 %v629, -20.0
  %v631 = vld [vmem:[%s1] sm:$0x3]
  %v632 = vld [vmem:[%s10] sm:$0xff]
  %v633 = vld [vmem:[%s10 + $0x8] sm:$0xff]
  %v634 = vld [vmem:[%s10 + $0x10] sm:$0xff]
  %v635 = vld [vmem:[%s10 + $0x18] sm:$0xff]
  %v636 = vld [vmem:[%s10 + $0x20] sm:$0xff]
  %v637 = vld [vmem:[%s10 + $0x28] sm:$0xff]
  %vm638 = vcmask 130048
  %v640 = vsel %vm638, %v630, 0
  %642 = vmatprep.subr.mxu0 0.0
  %643 = vmatpush1.msra.mxu0 %v636
  %644 = vmatprep.subr.mxu0 0.0
  %645 = vmatpush1.msra.mxu0 %v637
  %646 = vmatprep.subr.mxu0 0.0
  %647 = vmatpush1.msra.mxu0 0.0
  %648 = vmatprep.subr.mxu0 0.0
  %649 = vmatpush1.msra.mxu0 0.0
  %650 = vmatprep.subr.mxu0 0.0
  %651 = vmatpush1.msra.mxu0 0.0
  %652 = vmatprep.subr.mxu0 0.0
  %653 = vmatpush1.msra.mxu0 0.0
  %654 = vmatprep.subr.mxu0 0.0
  %655 = vmatpush1.msra.mxu0 0.0
  %656 = vmatprep.subr.mxu0 0.0
  %657 = vmatpush1.msra.mxu0 0.0
  %658 = vmatprep.subr.mxu0 0.0
  %659 = vmatpush1.msra.mxu0 0.0
  %660 = vmatprep.subr.mxu0 0.0
  %661 = vmatpush1.msra.mxu0 0.0
  %662 = vmatprep.subr.mxu0 0.0
  %663 = vmatpush1.msra.mxu0 0.0
  %664 = vmatprep.subr.mxu0 0.0
  %665 = vmatpush1.msra.mxu0 0.0
  %666 = vmatprep.subr.mxu0 0.0
  %667 = vmatpush1.msra.mxu0 0.0
  %668 = vmatprep.subr.mxu0 0.0
  %669 = vmatpush1.msra.mxu0 0.0
  %670 = vmatprep.subr.mxu0 0.0
  %671 = vmatpush1.msra.mxu0 0.0
  %672 = vmatprep.subr.mxu0 0.0
  %673 = vmatpush1.msra.mxu0 0.0
  %674 = vmatprep.subr.mxu0 0.0
  %675 = vmatpush1.msra.mxu0 0.0
  %676 = vmatprep.subr.mxu0 0.0
  %677 = vmatpush1.msra.mxu0 0.0
  %678 = vmatprep.subr.mxu0 0.0
  %679 = vmatpush1.msra.mxu0 0.0
  %680 = vmatprep.subr.mxu0 0.0
  %681 = vmatpush1.msra.mxu0 0.0
  %682 = vmatprep.subr.mxu0 0.0
  %683 = vmatpush1.msra.mxu0 0.0
  %684 = vmatprep.subr.mxu0 0.0
  %685 = vmatpush1.msra.mxu0 0.0
  %686 = vmatprep.subr.mxu0 0.0
  %687 = vmatpush1.msra.mxu0 0.0
  %688 = vmatprep.subr.mxu0 0.0
  %689 = vmatpush1.msra.mxu0 0.0
  %690 = vmatprep.subr.mxu0 0.0
  %691 = vmatpush1.msra.mxu0 0.0
  %692 = vmatprep.subr.mxu0 0.0
  %693 = vmatpush1.msra.mxu0 0.0
  %694 = vmatprep.subr.mxu0 0.0
  %695 = vmatpush1.msra.mxu0 0.0
  %696 = vmatprep.subr.mxu0 0.0
  %697 = vmatpush1.msra.mxu0 0.0
  %698 = vmatprep.subr.mxu0 0.0
  %699 = vmatpush1.msra.mxu0 0.0
  %700 = vmatprep.subr.mxu0 0.0
  %701 = vmatpush1.msra.mxu0 0.0
  %702 = vmatprep.subr.mxu0 0.0
  %703 = vmatpush1.msra.mxu0 0.0
  %704 = vmatprep.subr.mxu0 0.0
  %705 = vmatpush1.msra.mxu0 0.0
  %706 = vmatprep.mubr.f32.mxu0 0.0
  %707 = vmatmul.mubr.f32.gmra.mrb[0].mxu0 %v640
  %v708 = vpop.f32.mrb[0].mxu0
  %v709 = vadd.f32 0.0, %v708
  %v710 = vpop.f32.mrb[0].mxu0
  %711 = vdwg.mxu0
  %vm712 = vcmask 261120
  %v714 = vsel %vm712, %v631, 0
  %716 = vmatprep.subr.mxu0 0.0
  %717 = vmatpush1.msra.mxu0 %v632
  %718 = vmatprep.subr.mxu0 0.0
  %719 = vmatpush1.msra.mxu0 %v633
  %720 = vmatprep.subr.mxu0 0.0
  %721 = vmatpush1.msra.mxu0 %v634
  %722 = vmatprep.subr.mxu0 0.0
  %723 = vmatpush1.msra.mxu0 %v635
  %724 = vmatprep.subr.mxu0 0.0
  %725 = vmatpush1.msra.mxu0 0.0
  %726 = vmatprep.subr.mxu0 0.0
  %727 = vmatpush1.msra.mxu0 0.0
  %728 = vmatprep.subr.mxu0 0.0
  %729 = vmatpush1.msra.mxu0 0.0
  %730 = vmatprep.subr.mxu0 0.0
  %731 = vmatpush1.msra.mxu0 0.0
  %732 = vmatprep.subr.mxu0 0.0
  %733 = vmatpush1.msra.mxu0 0.0
  %734 = vmatprep.subr.mxu0 0.0
  %735 = vmatpush1.msra.mxu0 0.0
  %736 = vmatprep.subr.mxu0 0.0
  %737 = vmatpush1.msra.mxu0 0.0
  %738 = vmatprep.subr.mxu0 0.0
  %739 = vmatpush1.msra.mxu0 0.0
  %740 = vmatprep.subr.mxu0 0.0
  %741 = vmatpush1.msra.mxu0 0.0
  %742 = vmatprep.subr.mxu0 0.0
  %743 = vmatpush1.msra.mxu0 0.0
  %744 = vmatprep.subr.mxu0 0.0
  %745 = vmatpush1.msra.mxu0 0.0
  %746 = vmatprep.subr.mxu0 0.0
  %747 = vmatpush1.msra.mxu0 0.0
  %748 = vmatprep.subr.mxu0 0.0
  %749 = vmatpush1.msra.mxu0 0.0
  %750 = vmatprep.subr.mxu0 0.0
  %751 = vmatpush1.msra.mxu0 0.0
  %752 = vmatprep.subr.mxu0 0.0
  %753 = vmatpush1.msra.mxu0 0.0
  %754 = vmatprep.subr.mxu0 0.0
  %755 = vmatpush1.msra.mxu0 0.0
  %756 = vmatprep.subr.mxu0 0.0
  %757 = vmatpush1.msra.mxu0 0.0
  %758 = vmatprep.subr.mxu0 0.0
  %759 = vmatpush1.msra.mxu0 0.0
  %760 = vmatprep.subr.mxu0 0.0
  %761 = vmatpush1.msra.mxu0 0.0
  %762 = vmatprep.subr.mxu0 0.0
  %763 = vmatpush1.msra.mxu0 0.0
  %764 = vmatprep.subr.mxu0 0.0
  %765 = vmatpush1.msra.mxu0 0.0
  %766 = vmatprep.subr.mxu0 0.0
  %767 = vmatpush1.msra.mxu0 0.0
  %768 = vmatprep.subr.mxu0 0.0
  %769 = vmatpush1.msra.mxu0 0.0
  %770 = vmatprep.subr.mxu0 0.0
  %771 = vmatpush1.msra.mxu0 0.0
  %772 = vmatprep.subr.mxu0 0.0
  %773 = vmatpush1.msra.mxu0 0.0
  %774 = vmatprep.subr.mxu0 0.0
  %775 = vmatpush1.msra.mxu0 0.0
  %776 = vmatprep.subr.mxu0 0.0
  %777 = vmatpush1.msra.mxu0 0.0
  %778 = vmatprep.subr.mxu0 0.0
  %779 = vmatpush1.msra.mxu0 0.0
  %780 = vmatprep.mubr.f32.mxu0 0.0
  %781 = vmatmul.mubr.f32.gmra.mrb[0].mxu0 %v714
  %v782 = vpop.f32.mrb[0].mxu0
  %v783 = vadd.f32 %v709, %v782
  %v784 = vpop.f32.mrb[0].mxu0
  %785 = vdwg.mxu0
  %v786 = vld [vmem:[%s11] sm:$0x1]
  %v788 = vlaneseq
  %v789 = vshrl.u32 %v788, 7
  %v790 = vsub.s32 0, %v789
  %v791 = vrot.slane %v786, %v790
  %v793 = vadd.f32 %v783, %v791
  %v794 = vmax.f32 %v793, 0.0
  %v795 = vld [vmem:[%s12] sm:$0xff]
  %v796 = vld [vmem:[%s12 + $0x8] sm:$0xff]
  %v797 = vld [vmem:[%s12 + $0x10] sm:$0xff]
  %v798 = vld [vmem:[%s12 + $0x18] sm:$0xff]
  %v799 = vld [vmem:[%s13] sm:$0x1]
  %v801 = vlaneseq
  %v802 = vshrl.u32 %v801, 7
  %v803 = vsub.s32 0, %v802
  %v804 = vrot.slane %v799, %v803
  %v807 = vsel %vm712, %v794, 0
  %809 = vmatprep.subr.mxu0 0.0
  %810 = vmatpush1.msra.mxu0 %v795
  %811 = vmatprep.subr.mxu0 0.0
  %812 = vmatpush1.msra.mxu0 %v796
  %813 = vmatprep.subr.mxu0 0.0
  %814 = vmatpush1.msra.mxu0 %v797
  %815 = vmatprep.subr.mxu0 0.0
  %816 = vmatpush1.msra.mxu0 %v798
  %817 = vmatprep.subr.mxu0 0.0
  %818 = vmatpush1.msra.mxu0 0.0
  %819 = vmatprep.subr.mxu0 0.0
  %820 = vmatpush1.msra.mxu0 0.0
  %821 = vmatprep.subr.mxu0 0.0
  %822 = vmatpush1.msra.mxu0 0.0
  %823 = vmatprep.subr.mxu0 0.0
  %824 = vmatpush1.msra.mxu0 0.0
  %825 = vmatprep.subr.mxu0 0.0
  %826 = vmatpush1.msra.mxu0 0.0
  %827 = vmatprep.subr.mxu0 0.0
  %828 = vmatpush1.msra.mxu0 0.0
  %829 = vmatprep.subr.mxu0 0.0
  %830 = vmatpush1.msra.mxu0 0.0
  %831 = vmatprep.subr.mxu0 0.0
  %832 = vmatpush1.msra.mxu0 0.0
  %833 = vmatprep.subr.mxu0 0.0
  %834 = vmatpush1.msra.mxu0 0.0
  %835 = vmatprep.subr.mxu0 0.0
  %836 = vmatpush1.msra.mxu0 0.0
  %837 = vmatprep.subr.mxu0 0.0
  %838 = vmatpush1.msra.mxu0 0.0
  %839 = vmatprep.subr.mxu0 0.0
  %840 = vmatpush1.msra.mxu0 0.0
  %841 = vmatprep.subr.mxu0 0.0
  %842 = vmatpush1.msra.mxu0 0.0
  %843 = vmatprep.subr.mxu0 0.0
  %844 = vmatpush1.msra.mxu0 0.0
  %845 = vmatprep.subr.mxu0 0.0
  %846 = vmatpush1.msra.mxu0 0.0
  %847 = vmatprep.subr.mxu0 0.0
  %848 = vmatpush1.msra.mxu0 0.0
  %849 = vmatprep.subr.mxu0 0.0
  %850 = vmatpush1.msra.mxu0 0.0
  %851 = vmatprep.subr.mxu0 0.0
  %852 = vmatpush1.msra.mxu0 0.0
  %853 = vmatprep.subr.mxu0 0.0
  %854 = vmatpush1.msra.mxu0 0.0
  %855 = vmatprep.subr.mxu0 0.0
  %856 = vmatpush1.msra.mxu0 0.0
  %857 = vmatprep.subr.mxu0 0.0
  %858 = vmatpush1.msra.mxu0 0.0
  %859 = vmatprep.subr.mxu0 0.0
  %860 = vmatpush1.msra.mxu0 0.0
  %861 = vmatprep.subr.mxu0 0.0
  %862 = vmatpush1.msra.mxu0 0.0
  %863 = vmatprep.subr.mxu0 0.0
  %864 = vmatpush1.msra.mxu0 0.0
  %865 = vmatprep.subr.mxu0 0.0
  %866 = vmatpush1.msra.mxu0 0.0
  %867 = vmatprep.subr.mxu0 0.0
  %868 = vmatpush1.msra.mxu0 0.0
  %869 = vmatprep.subr.mxu0 0.0
  %870 = vmatpush1.msra.mxu0 0.0
  %871 = vmatprep.subr.mxu0 0.0
  %872 = vmatpush1.msra.mxu0 0.0
  %873 = vmatprep.mubr.f32.mxu0 0.0
  %874 = vmatmul.mubr.f32.gmra.mrb[0].mxu0 %v807
  %v875 = vpop.f32.mrb[0].mxu0
  %v876 = vadd.f32 %v804, %v875
  %v877 = vpop.f32.mrb[0].mxu0
  %878 = vdwg.mxu0
  %879 = vst [vmem:[%s14] sm:$0x3] 0.0
  %vm880 = vcmask 123904
  %881 = vst.msk [vmem:[%s14] sm:$0x3] %vm880, %v630
  %883 = vrot.lane.b32.xlu0 %v876, 16
  %v884 = vpop.permute.xlu0 %883
  %vm886 = vcmask 189568
  %887 = vst.msk [vmem:[%s14] sm:$0x3] %vm886, %v884
  // Predicated region
  $region58: #{styletransfer_forward.1} parent=0 // pred_check
    _
  $region59: #{styletransfer_forward.1} parent=0 // pred_check_branch
    %889 = sbr.rel (0) target = $region61
  $region60: #{styletransfer_forward.1} parent=0 // pred_region
    _
  $region61: #{styletransfer_forward.1} parent=0 // pred_fallthru
    _
  // Predicated region
  $region62: #{styletransfer_forward.1} parent=0 // pred_check
    _
  $region63: #{styletransfer_forward.1} parent=0 // pred_check_branch
    %891 = sbr.rel (0) target = $region65
  $region64: #{styletransfer_forward.1} parent=0 // pred_region
    _
  $region65: #{styletransfer_forward.1} parent=0 // pred_fallthru
    _

</llo_original>
